<compile_context>
chip_gen: v6e
topology: v6e:2x2x1
jax: 0.10.0
libtpu: 0.0.40
codegen_flags: <defaults>
</compile_context>

<pallas_src>
import functools

import jax
import jax.numpy as jnp
from jax.experimental import pallas as pl
from jax.experimental.pallas import tpu as pltpu

_LANE = 128


def _coselu_scalar(x):
    # coselu(x, a=0.5, b=1, c=1, d=0.5) with elu(z) = z if z > 0 else exp(z)-1
    elu_x = jnp.where(x > 0, x, jnp.expm1(x))
    return 0.5 * (x + 0.5 * jnp.cos(x)) * elu_x


def _coselu1_scalar(x):
    # coselu1(x, a=0.5, b=1, d=0.5)
    return 0.5 * (2.0 * x + 0.5 * (jnp.cos(x) - jnp.sin(x)))


@functools.lru_cache(maxsize=1)
def _chip_config():
    """Best-effort per-generation tuning: (block_bytes, multi_core, bf16_vpu)."""
    kind = ""
    try:
        kind = jax.devices()[0].device_kind.lower()
    except Exception:  # non-TPU backend / query failure -> conservative defaults
        pass
    if "v6" in kind or "trillium" in kind:
        # 1 TC; 4 MiB blocks -> 16 MiB resident (2 bufs x in+out) < 32 MiB
        # scoped-VMEM default, ~85% of HBM roofline for pure streaming.
        return 4 << 20, False, True
    if "7" in kind:  # TPU7x / v7x
        # 2 TCs share HBM; 16 MiB resident stays well under the 32 MiB scoped
        # default and the 64 MiB physical VMEM per TC.
        # TODO(synk): profile-verify both TCs stream; if not, switch the grid
        # axis to pltpu.CORE_PARALLEL (and optionally 8 MiB blocks with a
        # raised vmem_limit_bytes).
        return 4 << 20, True, True
    if "v5 lite" in kind or "v5lite" in kind or "v5e" in kind:
        # 1 TC; 2 MiB blocks -> 8 MiB resident < 16 MiB scoped-VMEM default.
        return 2 << 20, False, False
    if "v4" in kind or "v5" in kind:
        # v4 / v5p megacore: keep >=2 parallel grid steps, conservative blocks.
        return 2 << 20, True, False
    return 2 << 20, False, False


def _coselu_kernel(scal_ref, x_ref, o_ref, *, compute_dtype):
    # scal_ref (SMEM f32[3]): [alpha, coselu(alpha), coselu1(coselu(alpha))].
    alpha = scal_ref[0].astype(compute_dtype)
    alpha_coselu = scal_ref[1].astype(compute_dtype)
    alpha_coselu_d1 = scal_ref[2].astype(compute_dtype)
    x = x_ref[...].astype(compute_dtype)
    x_alpha = (x - alpha) * alpha_coselu_d1 + alpha
    o_ref[...] = jnp.where(x >= alpha, x_alpha, alpha_coselu).astype(o_ref.dtype)


def coselu_forward(x, alpha=0.0, *, donate_input=False):
    """CosELU module forward pass. x: any-shape float array."""
    orig_shape = x.shape
    orig_dtype = x.dtype
    if x.size == 0:
        return x

    # Native-dtype HBM traffic for f32/bf16/f16; other dtypes go via f32.
    if x.dtype in (jnp.float32, jnp.bfloat16, jnp.float16):
        data = x
    else:
        data = x.astype(jnp.float32)
    dt = data.dtype
    itemsize = dt.itemsize
    sub = 8 if itemsize == 4 else 16              # sublane packing per dtype
    block_bytes, multi_core, bf16_vpu = _chip_config()

    flat = data.reshape(-1)                       # contiguous -> bitcast (free)
    n = flat.shape[0]
    rem = n % _LANE
    if rem:                                       # rare lane-ragged sizes only
        flat = jnp.pad(flat, (0, _LANE - rem))
    x2 = flat.reshape(-1, _LANE)                  # (m, 128), lane-dense
    m = x2.shape[0]

    # Biggest lane-dense block the per-chip VMEM budget allows; one block when
    # it fits on single-TC chips, >=2 parallel blocks on multi-TC chips.
    max_rows = max(sub, (block_bytes // (_LANE * itemsize)) // sub * sub)
    if m <= sub:
        block_rows = m                            # full-extent rows (any m OK)
    else:
        want = pl.cdiv(m, 2) if multi_core else m
        want = pl.cdiv(want, sub) * sub
        block_rows = min(max_rows, want, (m // sub) * sub)
    grid = (pl.cdiv(m, block_rows),)              # last block may be partial

    # Hoisted scalar math: once per call, not per grid step / element.
    a = jnp.asarray(alpha, dtype=jnp.float32)
    a_coselu = _coselu_scalar(a)
    a_coselu_d1 = _coselu1_scalar(a_coselu)
    scalars = jnp.stack([a, a_coselu, a_coselu_d1]).astype(jnp.float32)

    # bf16 kernels compute natively on chips with a bf16 VPU (v6e/v7x),
    # otherwise upcast in-register (HBM traffic stays in the native dtype).
    compute_dtype = dt if (dt == jnp.bfloat16 and bf16_vpu) else jnp.float32

    cost = pl.CostEstimate(
        flops=5 * m * _LANE,                      # cmp, sub, mul, add, select
        transcendentals=0,                        # hoisted to the wrapper
        bytes_accessed=2 * m * _LANE * itemsize,  # read x + write out
    )

    out2 = pl.pallas_call(
        functools.partial(_coselu_kernel, compute_dtype=compute_dtype),
        out_shape=jax.ShapeDtypeStruct((m, _LANE), dt),
        grid=grid,
        in_specs=[
            pl.BlockSpec(memory_space=pltpu.MemorySpace.SMEM),     # 3 scalars
            pl.BlockSpec((block_rows, _LANE), lambda i: (i, 0)),   # x block
        ],
        out_specs=pl.BlockSpec((block_rows, _LANE), lambda i: (i, 0)),
        compiler_params=pltpu.CompilerParams(
            dimension_semantics=("parallel",)),
        cost_estimate=cost,
        input_output_aliases=({1: 0} if donate_input else {}),
    )(scalars, x2)

    out_flat = out2.reshape(-1)
    if rem:
        out_flat = out_flat[:n]
    out = out_flat.reshape(orig_shape)
    if out.dtype != orig_dtype:
        out = out.astype(orig_dtype)
    return out


def _reference(x, alpha=0.0):
    # Pure-JAX reference mirroring the PyTorch code literally (f32 compute).
    xf = x.astype(jnp.float32)
    a = jnp.asarray(alpha, dtype=jnp.float32)
    alpha_coselu = _coselu_scalar(a)
    alpha_coselu_d1 = _coselu1_scalar(alpha_coselu)
    alpha_mask = (xf >= a).astype(jnp.float32)
    act_mask = 1.0 - alpha_mask
    x_alpha = (xf - a) * alpha_coselu_d1 + a
    return (x_alpha * alpha_mask + alpha_coselu * act_mask).astype(x.dtype)


if __name__ == "__main__":
    k0, k1, k2 = jax.random.split(jax.random.PRNGKey(0), 3)

    # 1) NCHW activation, f32, module-default alpha=0.0 (learnable init).
    x1 = jax.random.normal(k0, (2, 4, 16, 16), dtype=jnp.float32)
    out1 = jax.block_until_ready(coselu_forward(x1, alpha=0.0))
    ref1 = _reference(x1, alpha=0.0)
    assert out1.shape == x1.shape and out1.dtype == x1.dtype
    assert jnp.allclose(out1, ref1, atol=1e-6, rtol=1e-6), "f32 mismatch"

    # 2) Rows not a multiple of the block (partial sublane last block), alpha>0.
    x2 = jax.random.normal(k1, (41, 128), dtype=jnp.float32)
    out2 = jax.block_until_ready(coselu_forward(x2, alpha=0.3))
    ref2 = _reference(x2, alpha=0.3)
    assert jnp.allclose(out2, ref2, atol=1e-6, rtol=1e-6), "partial-block mismatch"

    # 3) Lane-ragged bf16 input (native bf16 HBM traffic; bf16 VPU on v6e/v7x).
    x3 = jax.random.normal(k2, (5, 3, 17), dtype=jnp.bfloat16)
    out3 = jax.block_until_ready(coselu_forward(x3, alpha=0.25))
    ref3 = _reference(x3, alpha=0.25)
    assert out3.shape == x3.shape and out3.dtype == x3.dtype
    assert jnp.allclose(out3.astype(jnp.float32), ref3.astype(jnp.float32),
                        atol=2e-2, rtol=2e-2), "bf16 mismatch"

    print("KERNEL_OK")
</pallas_src>

<mosaic_0001>
module attributes {stable_mosaic.version = 11 : i64} {
  func.func @_coselu_kernel(%arg0: i32, %arg1: memref<3xf32, #tpu.memory_space<smem>>, %arg2: memref<16x128xf32, #tpu.memory_space<vmem>>, %arg3: memref<16x128xf32, #tpu.memory_space<vmem>>) attributes {dimension_semantics = [#tpu.dimension_semantics<parallel>], iteration_bounds = array<i64: 1>, scalar_prefetch = 0 : i64, scratch_operands = 0 : i64, tpu.core_type = #tpu.core_type<tc>, window_params = [{transform_indices = @transform_0, window_bounds = array<i64: 3>}, {transform_indices = @transform_1, window_bounds = array<i64: 16, 128>}, {transform_indices = @transform_2, window_bounds = array<i64: 16, 128>}]} {
    %c0 = arith.constant 0 : index
    %0 = memref.load %arg1[%c0] : memref<3xf32, #tpu.memory_space<smem>>
    %c1 = arith.constant 1 : index
    %1 = memref.load %arg1[%c1] : memref<3xf32, #tpu.memory_space<smem>>
    %c2 = arith.constant 2 : index
    %2 = memref.load %arg1[%c2] : memref<3xf32, #tpu.memory_space<smem>>
    %c0_0 = arith.constant 0 : index
    %c0_1 = arith.constant 0 : index
    %3 = vector.load %arg2[%c0_0, %c0_1] : memref<16x128xf32, #tpu.memory_space<vmem>>, vector<16x128xf32>
    %4 = vector.broadcast %0 : f32 to vector<16x128xf32>
    %5 = arith.subf %3, %4 : vector<16x128xf32>
    %6 = vector.broadcast %2 : f32 to vector<16x128xf32>
    %7 = arith.mulf %5, %6 : vector<16x128xf32>
    %8 = vector.broadcast %0 : f32 to vector<16x128xf32>
    %9 = arith.addf %7, %8 : vector<16x128xf32>
    %10 = vector.broadcast %0 : f32 to vector<16x128xf32>
    %11 = arith.cmpf oge, %3, %10 : vector<16x128xf32>
    %12 = vector.broadcast %1 : f32 to vector<16x128xf32>
    %13 = arith.select %11, %9, %12 : vector<16x128xi1>, vector<16x128xf32>
    %c0_2 = arith.constant 0 : index
    %c0_3 = arith.constant 0 : index
    %14 = vector.load %arg3[%c0_2, %c0_3] : memref<16x128xf32, #tpu.memory_space<vmem>>, vector<16x128xf32>
    tpu.vector_store %arg3[%c0_2, %c0_3], %13 {strides = array<i32>} : memref<16x128xf32, #tpu.memory_space<vmem>>, vector<16x128xf32>,
    return
  }
  func.func @transform_0(%arg0: i32) -> i32 {
    %c0_i32 = arith.constant 0 : i32
    %c0_i32_0 = arith.constant 0 : i32
    return %c0_i32 : i32
  }
  func.func @transform_1(%arg0: i32) -> (i32, i32) {
    %c0_i32 = arith.constant 0 : i32
    %c0_i32_0 = arith.constant 0 : i32
    return %arg0, %c0_i32 : i32, i32
  }
  func.func @transform_2(%arg0: i32) -> (i32, i32) {
    %c0_i32 = arith.constant 0 : i32
    %c0_i32_0 = arith.constant 0 : i32
    return %arg0, %c0_i32 : i32, i32
  }
}

</mosaic_0001>

<llo_original>
// kernel: tpu_custom_call.1
$region0: #{tpu_custom_call.1}
  #allocation0 [shape = 'u32[]', space=smem, size = 0x4, offset = 0x4, fixed_abs, tag = 'smem constant byte address 0x4 - core index']
  #allocation1 [shape = 'u32[144,128]{1,0:T(1,128)}', space=vmem, size = 0x12000, scoped, tag = 'internal scratch']
  %s0 = inlined_call_operand.hbm [shape: f32[3], index: 0, kind: input, shape index: {}]
  %s1 = inlined_call_operand.hbm [shape: f32[16,128], index: 1, kind: input, shape index: {}]
  %s2 = inlined_call_operand.hbm [shape: f32[16,128], index: 2, kind: output, shape index: {}]
  %s3 = sld [smem:[#allocation0]]
  $region26: #{tpu_custom_call.1} parent=0
    _
  %s5 = ssub.s32 1, %s3
  %s6 = scalar_select 0, %s5, %s3
  $region1: #{tpu_custom_call.1} parent=0
    #allocation2 [shape = 'u8[512]{0}', space=smem, size = 0x200, scoped, tag = 'input window, operand 0, single buffered']
    #allocation3 [shape = 's32[1]{0}', space=sflag, size = 0x4, scoped, tag = 'scoped memory for tpu_custom_call.1']
    #allocation4 [shape = 's32[1]{0}', space=sflag, size = 0x4, scoped, tag = 'scoped memory for tpu_custom_call.1']
    #allocation5 [shape = 's32[1]{0}', space=sflag, size = 0x4, scoped, tag = 'scoped memory for tpu_custom_call.1']
    #allocation6 [shape = 'u8[8192]{0}', space=vmem, size = 0x2000, scoped, tag = 'input window, operand 1, single buffered']
    #allocation7 [shape = 'u8[8192]{0}', space=vmem, size = 0x2000, scoped, tag = 'output window, operand 0, single buffered']
    %7 = vsyncpa [#allocation5], 0
    %8 = vsyncpa [#allocation3], 0
    %9 = vsyncpa [#allocation4], 0
    // Predicated region
    $region2: #{tpu_custom_call.1} parent=1 // pred_check
      _
    $region3: #{tpu_custom_call.1} parent=1 // pred_check_branch
      %11 = sbr.rel (0) target = $region5
    $region4: #{tpu_custom_call.1} parent=1 // pred_region
      %s13 = ssub.s32 16, 16
      %14 = vsyncadd [#allocation5], %s13
      %17 = dma.hbm_to_smem %s0, 16, [#allocation2], [#allocation5]
    $region5: #{tpu_custom_call.1} parent=1 // pred_fallthru
      _
    // Predicated region
    $region6: #{tpu_custom_call.1} parent=1 // pred_check
      _
    $region7: #{tpu_custom_call.1} parent=1 // pred_check_branch
      %19 = sbr.rel (0) target = $region9
    $region8: #{tpu_custom_call.1} parent=1 // pred_region
      %s21 = ssub.s32 256, 256
      %22 = vsyncadd [#allocation3], %s21
      %s23 = sshll.u32 [#allocation6], 4
      %s24 = int_to_ptr.vmem [resolvable:$true] %s23
      %29 = dma.hbm_to_vmem [thread:$0]  %s1, 256, %s24, [#allocation3], 128, 128, 8
    $region9: #{tpu_custom_call.1} parent=1 // pred_fallthru
      _
    // Predicated region
    $region10: #{tpu_custom_call.1} parent=1 // pred_check
      _
    $region11: #{tpu_custom_call.1} parent=1 // pred_check_branch
      %31 = sbr.rel (0) target = $region13
    $region12: #{tpu_custom_call.1} parent=1 // pred_region
      %32 = dma.done [#allocation5], 16
    $region13: #{tpu_custom_call.1} parent=1 // pred_fallthru
      _
    // Predicated region
    $region14: #{tpu_custom_call.1} parent=1 // pred_check
      _
    $region15: #{tpu_custom_call.1} parent=1 // pred_check_branch
      %34 = sbr.rel (0) target = $region17
    $region16: #{tpu_custom_call.1} parent=1 // pred_region
      %35 = dma.done [#allocation3], 256
    $region17: #{tpu_custom_call.1} parent=1 // pred_fallthru
      _
    %36 = sfence
    %s37 = sld [smem:[#allocation2]]
    %s38 = sld [smem:[#allocation2 + $0x1]]
    %s39 = sld [smem:[#allocation2 + $0x2]]
    %v40 = vld [vmem:[#allocation6] sm:$0xff]
    %v41 = vld [vmem:[#allocation6 + $0x8] sm:$0xff]
    %v42 = vstv %s37
    %v43 = vsub.f32 %v40, %v42
    %v44 = vsub.f32 %v41, %v42
    %v45 = vstv %s39
    %v46 = vmul.f32 %v43, %v45
    %v47 = vmul.f32 %v44, %v45
    %v48 = vadd.f32 %v46, %v42
    %v49 = vadd.f32 %v47, %v42
    %vm50 = vcmp.ge.f32.partialorder %v40, %v42
    %vm51 = vcmp.ge.f32.partialorder %v41, %v42
    %v52 = vstv %s38
    %v53 = vsel %vm50, %v48, %v52
    %v54 = vsel %vm51, %v49, %v52
    %55 = vst [vmem:[#allocation7] sm:$0xff] %v53
    %56 = vst [vmem:[#allocation7 + $0x8] sm:$0xff] %v54
    // Predicated region
    $region18: #{tpu_custom_call.1} parent=1 // pred_check
      _
    $region19: #{tpu_custom_call.1} parent=1 // pred_check_branch
      %58 = sbr.rel (0) target = $region21
    $region20: #{tpu_custom_call.1} parent=1 // pred_region
      %s60 = ssub.s32 256, 256
      %61 = vsyncadd [#allocation4], %s60
      %s62 = sshll.u32 [#allocation7], 4
      %s63 = int_to_ptr.vmem [resolvable:$true] %s62
      %68 = dma.vmem_to_hbm [thread:$0]  %s63, 256, %s2, [#allocation4], 128, 128, 8
    $region21: #{tpu_custom_call.1} parent=1 // pred_fallthru
      _
    // Predicated region
    $region22: #{tpu_custom_call.1} parent=1 // pred_check
      _
    $region23: #{tpu_custom_call.1} parent=1 // pred_check_branch
      %70 = sbr.rel (0) target = $region25
    $region24: #{tpu_custom_call.1} parent=1 // pred_region
      %71 = dma.done [#allocation4], 256
    $region25: #{tpu_custom_call.1} parent=1 // pred_fallthru
      _
    %72 = vsyncpa [#allocation3], 1
    %73 = vsyncpa [#allocation4], 1
    %74 = vsyncpa [#allocation5], 1

</llo_original>
